<compile_context>
chip_gen: v5e
topology: v5e:2x2
jax: 0.10.0
libtpu: 0.0.40
codegen_flags: <defaults>
</compile_context>

<pallas_src>
import jax
import jax.numpy as jnp
from jax.experimental import pallas as pl
from jax.experimental.pallas import tpu as pltpu


def _adapter_kernel(x_ref, mask_ref, w1_ref, b1_ref, w2_ref, b2_ref,
                    wf_ref, bf_ref, o_ref):
    # x_ref: (tm, H) f32, mask/b1/b2: (1, H) f32, bf: (1, O) f32,
    # w1/w2: (H, H) bf16, wf: (H, O) bf16.
    m = jax.nn.sigmoid(mask_ref[...])                   # (1, H) f32, EUP
    xm = x_ref[...] * m                                 # sigmoid(mask) * feature

    # Linear1 + ReLU  (bf16 operands, f32 accumulation on the MXU)
    h = jnp.dot(xm.astype(jnp.bfloat16), w1_ref[...],
                preferred_element_type=jnp.float32) + b1_ref[...]
    h = jnp.maximum(h, 0.0)

    # Linear2
    h = jnp.dot(h.astype(jnp.bfloat16), w2_ref[...],
                preferred_element_type=jnp.float32) + b2_ref[...]

    # Residual add around the adapter MLP (f32)
    out_feat = h + xm

    # Final projection
    y = jnp.dot(out_feat.astype(jnp.bfloat16), wf_ref[...],
                preferred_element_type=jnp.float32) + bf_ref[...]
    o_ref[...] = y.astype(o_ref.dtype)


def self_image_adapter(feature, mask, w1, b1, w2, b2, wf, bf, *, tm=256):
    """feature: (N, H) float32.  Weights already transposed to (in, out)."""
    N, H = feature.shape
    O = wf.shape[1]

    # Tail handling: pad rows up to a multiple of tm; padded rows are computed
    # (harmless, no cross-row interaction) and sliced off afterwards.
    n_tiles = pl.cdiv(N, tm)
    Np = n_tiles * tm
    if Np != N:
        feature = jnp.pad(feature, ((0, Np - N), (0, 0)))

    # MXU operands in bf16; accumulation stays f32 inside the kernel.
    w1b = w1.astype(jnp.bfloat16)
    w2b = w2.astype(jnp.bfloat16)
    wfb = wf.astype(jnp.bfloat16)

    # Grid-invariant operands: single-buffered (index_map is constant).
    single = dict(pipeline_mode=pl.Buffered(1))

    out = pl.pallas_call(
        _adapter_kernel,
        out_shape=jax.ShapeDtypeStruct((Np, O), feature.dtype),
        grid_spec=pltpu.PrefetchScalarGridSpec(
            num_scalar_prefetch=0,
            grid=(n_tiles,),
            in_specs=[
                pl.BlockSpec((tm, H), lambda i: (i, 0)),              # x tile (double-buffered)
                pl.BlockSpec((1, H), lambda i: (0, 0), **single),     # mask
                pl.BlockSpec((H, H), lambda i: (0, 0), **single),     # W1^T (bf16)
                pl.BlockSpec((1, H), lambda i: (0, 0), **single),     # b1
                pl.BlockSpec((H, H), lambda i: (0, 0), **single),     # W2^T (bf16)
                pl.BlockSpec((1, H), lambda i: (0, 0), **single),     # b2
                pl.BlockSpec((H, O), lambda i: (0, 0), **single),     # Wf^T (bf16)
                pl.BlockSpec((1, O), lambda i: (0, 0), **single),     # bf
            ],
            out_specs=pl.BlockSpec((tm, O), lambda i: (i, 0)),
        ),
        compiler_params=pltpu.CompilerParams(
            dimension_semantics=("parallel",),
            vmem_limit_bytes=64 * 1024 * 1024,
        ),
    )(feature, mask.reshape(1, H), w1b, b1.reshape(1, H),
      w2b, b2.reshape(1, H), wfb, bf.reshape(1, O))

    return out[:N] if Np != N else out


def _reference(feature, mask, w1, b1, w2, b2, wf, bf):
    m = jax.nn.sigmoid(mask)
    xm = m * feature
    h = jnp.maximum(xm @ w1 + b1, 0.0)
    h = h @ w2 + b2
    out_feat = h + xm
    return out_feat @ wf + bf


if __name__ == "__main__":
    # Small shapes consistent with the module (hidden_size, output scaled down).
    # N = 400 is NOT a multiple of tm=256: exercises pad + 2-step grid.
    batch, seq = 2, 200
    hidden, output = 128, 128
    N = batch * seq

    key = jax.random.PRNGKey(0)
    ks = jax.random.split(key, 8)

    feature = jax.random.normal(ks[0], (N, hidden), dtype=jnp.float32)
    # Deterministic parameter init (synthetic, not a checkpoint load).
    mask = jax.random.normal(ks[1], (hidden,), dtype=jnp.float32) * 0.1
    w1 = jax.random.normal(ks[2], (hidden, hidden), dtype=jnp.float32) * 0.02
    b1 = jax.random.normal(ks[3], (hidden,), dtype=jnp.float32) * 0.01
    w2 = jax.random.normal(ks[4], (hidden, hidden), dtype=jnp.float32) * 0.02
    b2 = jax.random.normal(ks[5], (hidden,), dtype=jnp.float32) * 0.01
    wf = jax.random.normal(ks[6], (hidden, output), dtype=jnp.float32) * 0.02
    bf = jax.random.normal(ks[7], (output,), dtype=jnp.float32) * 0.01

    y = self_image_adapter(feature, mask, w1, b1, w2, b2, wf, bf)
    y = jax.block_until_ready(y)

    y_ref = _reference(feature, mask, w1, b1, w2, b2, wf, bf)
    assert y.shape == (N, output)
    # bf16 MXU operands with f32 accumulation -> slightly looser tolerance.
    assert jnp.allclose(y, y_ref, atol=2e-2, rtol=2e-2)

    print("KERNEL_OK")
</pallas_src>

<mosaic_0001>
module attributes {stable_mosaic.version = 11 : i64} {
  func.func @_adapter_kernel(%arg0: i32, %arg1: memref<256x128xf32, #tpu.memory_space<vmem>>, %arg2: memref<1x128xf32, #tpu.memory_space<vmem>>, %arg3: memref<128x128xbf16, #tpu.memory_space<vmem>>, %arg4: memref<1x128xf32, #tpu.memory_space<vmem>>, %arg5: memref<128x128xbf16, #tpu.memory_space<vmem>>, %arg6: memref<1x128xf32, #tpu.memory_space<vmem>>, %arg7: memref<128x128xbf16, #tpu.memory_space<vmem>>, %arg8: memref<1x128xf32, #tpu.memory_space<vmem>>, %arg9: memref<256x128xf32, #tpu.memory_space<vmem>>) attributes {dimension_semantics = [#tpu.dimension_semantics<parallel>], iteration_bounds = array<i64: 2>, scalar_prefetch = 0 : i64, scratch_operands = 0 : i64, tpu.core_type = #tpu.core_type<tc>, window_params = [{transform_indices = @transform_0, window_bounds = array<i64: 256, 128>}, {pipeline_mode = #tpu.pipeline_mode<synchronous>, transform_indices = @transform_1, window_bounds = array<i64: 1, 128>}, {pipeline_mode = #tpu.pipeline_mode<synchronous>, transform_indices = @transform_2, window_bounds = array<i64: 128, 128>}, {pipeline_mode = #tpu.pipeline_mode<synchronous>, transform_indices = @transform_3, window_bounds = array<i64: 1, 128>}, {pipeline_mode = #tpu.pipeline_mode<synchronous>, transform_indices = @transform_4, window_bounds = array<i64: 128, 128>}, {pipeline_mode = #tpu.pipeline_mode<synchronous>, transform_indices = @transform_5, window_bounds = array<i64: 1, 128>}, {pipeline_mode = #tpu.pipeline_mode<synchronous>, transform_indices = @transform_6, window_bounds = array<i64: 128, 128>}, {pipeline_mode = #tpu.pipeline_mode<synchronous>, transform_indices = @transform_7, window_bounds = array<i64: 1, 128>}, {transform_indices = @transform_8, window_bounds = array<i64: 256, 128>}]} {
    %c0 = arith.constant 0 : index
    %c0_0 = arith.constant 0 : index
    %0 = vector.load %arg2[%c0, %c0_0] : memref<1x128xf32, #tpu.memory_space<vmem>>, vector<1x128xf32>
    %1 = arith.negf %0 : vector<1x128xf32>
    %2 = math.exp %1 : vector<1x128xf32>
    %cst = arith.constant 1.000000e+00 : f32
    %3 = vector.broadcast %cst : f32 to vector<1x128xf32>
    %4 = arith.addf %3, %2 : vector<1x128xf32>
    %5 = arith.divf %3, %4 : vector<1x128xf32>
    %c0_1 = arith.constant 0 : index
    %c0_2 = arith.constant 0 : index
    %6 = vector.load %arg1[%c0_1, %c0_2] : memref<256x128xf32, #tpu.memory_space<vmem>>, vector<256x128xf32>
    %7 = vector.broadcast %5 : vector<1x128xf32> to vector<256x128xf32>
    %8 = arith.mulf %6, %7 : vector<256x128xf32>
    %9 = arith.truncf %8 : vector<256x128xf32> to vector<256x128xbf16>
    %c0_3 = arith.constant 0 : index
    %c0_4 = arith.constant 0 : index
    %10 = vector.load %arg3[%c0_3, %c0_4] : memref<128x128xbf16, #tpu.memory_space<vmem>>, vector<128x128xbf16>
    %cst_5 = arith.constant dense<0.000000e+00> : vector<256x128xf32>
    %11 = tpu.matmul %9, %10, %cst_5 {dimension_numbers = #tpu.dot_dimension_numbers<[1], [0], [0], [1], [0, 0, 1, 1], [], []>} : vector<256x128xbf16>, vector<128x128xbf16>, vector<256x128xf32> -> vector<256x128xf32>
    %c0_6 = arith.constant 0 : index
    %c0_7 = arith.constant 0 : index
    %12 = vector.load %arg4[%c0_6, %c0_7] : memref<1x128xf32, #tpu.memory_space<vmem>>, vector<1x128xf32>
    %13 = vector.broadcast %12 : vector<1x128xf32> to vector<256x128xf32>
    %14 = arith.addf %11, %13 : vector<256x128xf32>
    %cst_8 = arith.constant 0.000000e+00 : f32
    %15 = vector.broadcast %cst_8 : f32 to vector<256x128xf32>
    %16 = arith.maximumf %14, %15 : vector<256x128xf32>
    %17 = arith.truncf %16 : vector<256x128xf32> to vector<256x128xbf16>
    %c0_9 = arith.constant 0 : index
    %c0_10 = arith.constant 0 : index
    %18 = vector.load %arg5[%c0_9, %c0_10] : memref<128x128xbf16, #tpu.memory_space<vmem>>, vector<128x128xbf16>
    %cst_11 = arith.constant dense<0.000000e+00> : vector<256x128xf32>
    %19 = tpu.matmul %17, %18, %cst_11 {dimension_numbers = #tpu.dot_dimension_numbers<[1], [0], [0], [1], [0, 0, 1, 1], [], []>} : vector<256x128xbf16>, vector<128x128xbf16>, vector<256x128xf32> -> vector<256x128xf32>
    %c0_12 = arith.constant 0 : index
    %c0_13 = arith.constant 0 : index
    %20 = vector.load %arg6[%c0_12, %c0_13] : memref<1x128xf32, #tpu.memory_space<vmem>>, vector<1x128xf32>
    %21 = vector.broadcast %20 : vector<1x128xf32> to vector<256x128xf32>
    %22 = arith.addf %19, %21 : vector<256x128xf32>
    %23 = arith.addf %22, %8 : vector<256x128xf32>
    %24 = arith.truncf %23 : vector<256x128xf32> to vector<256x128xbf16>
    %c0_14 = arith.constant 0 : index
    %c0_15 = arith.constant 0 : index
    %25 = vector.load %arg7[%c0_14, %c0_15] : memref<128x128xbf16, #tpu.memory_space<vmem>>, vector<128x128xbf16>
    %cst_16 = arith.constant dense<0.000000e+00> : vector<256x128xf32>
    %26 = tpu.matmul %24, %25, %cst_16 {dimension_numbers = #tpu.dot_dimension_numbers<[1], [0], [0], [1], [0, 0, 1, 1], [], []>} : vector<256x128xbf16>, vector<128x128xbf16>, vector<256x128xf32> -> vector<256x128xf32>
    %c0_17 = arith.constant 0 : index
    %c0_18 = arith.constant 0 : index
    %27 = vector.load %arg8[%c0_17, %c0_18] : memref<1x128xf32, #tpu.memory_space<vmem>>, vector<1x128xf32>
    %28 = vector.broadcast %27 : vector<1x128xf32> to vector<256x128xf32>
    %29 = arith.addf %26, %28 : vector<256x128xf32>
    %c0_19 = arith.constant 0 : index
    %c0_20 = arith.constant 0 : index
    %30 = vector.load %arg9[%c0_19, %c0_20] : memref<256x128xf32, #tpu.memory_space<vmem>>, vector<256x128xf32>
    tpu.vector_store %arg9[%c0_19, %c0_20], %29 {strides = array<i32>} : memref<256x128xf32, #tpu.memory_space<vmem>>, vector<256x128xf32>,
    return
  }
  func.func @transform_0(%arg0: i32) -> (i32, i32) {
    %c0_i32 = arith.constant 0 : i32
    %c0_i32_0 = arith.constant 0 : i32
    return %arg0, %c0_i32 : i32, i32
  }
  func.func @transform_1(%arg0: i32) -> (i32, i32) {
    %c0_i32 = arith.constant 0 : i32
    %c0_i32_0 = arith.constant 0 : i32
    %c0_i32_1 = arith.constant 0 : i32
    return %c0_i32, %c0_i32_0 : i32, i32
  }
  func.func @transform_2(%arg0: i32) -> (i32, i32) {
    %c0_i32 = arith.constant 0 : i32
    %c0_i32_0 = arith.constant 0 : i32
    %c0_i32_1 = arith.constant 0 : i32
    return %c0_i32, %c0_i32_0 : i32, i32
  }
  func.func @transform_3(%arg0: i32) -> (i32, i32) {
    %c0_i32 = arith.constant 0 : i32
    %c0_i32_0 = arith.constant 0 : i32
    %c0_i32_1 = arith.constant 0 : i32
    return %c0_i32, %c0_i32_0 : i32, i32
  }
  func.func @transform_4(%arg0: i32) -> (i32, i32) {
    %c0_i32 = arith.constant 0 : i32
    %c0_i32_0 = arith.constant 0 : i32
    %c0_i32_1 = arith.constant 0 : i32
    return %c0_i32, %c0_i32_0 : i32, i32
  }
  func.func @transform_5(%arg0: i32) -> (i32, i32) {
    %c0_i32 = arith.constant 0 : i32
    %c0_i32_0 = arith.constant 0 : i32
    %c0_i32_1 = arith.constant 0 : i32
    return %c0_i32, %c0_i32_0 : i32, i32
  }
  func.func @transform_6(%arg0: i32) -> (i32, i32) {
    %c0_i32 = arith.constant 0 : i32
    %c0_i32_0 = arith.constant 0 : i32
    %c0_i32_1 = arith.constant 0 : i32
    return %c0_i32, %c0_i32_0 : i32, i32
  }
  func.func @transform_7(%arg0: i32) -> (i32, i32) {
    %c0_i32 = arith.constant 0 : i32
    %c0_i32_0 = arith.constant 0 : i32
    %c0_i32_1 = arith.constant 0 : i32
    return %c0_i32, %c0_i32_0 : i32, i32
  }
  func.func @transform_8(%arg0: i32) -> (i32, i32) {
    %c0_i32 = arith.constant 0 : i32
    %c0_i32_0 = arith.constant 0 : i32
    return %arg0, %c0_i32 : i32, i32
  }
}

</mosaic_0001>

<llo_original>
// kernel: tpu_custom_call.1
$region0: #{tpu_custom_call.1}
  #allocation0 [shape = 'u32[]', space=smem, size = 0x4, offset = 0x4, fixed_abs, tag = 'smem constant byte address 0x4 - core index']
  #allocation1 [shape = 'u32[72,128]{1,0:T(1,128)}', space=vmem, size = 0x9000, scoped, tag = 'internal scratch']
  %s0 = inlined_call_operand.hbm [shape: f32[512,128], index: 0, kind: input, shape index: {}]
  %s1 = inlined_call_operand.hbm [shape: f32[1,128], index: 1, kind: input, shape index: {}]
  %s2 = inlined_call_operand.hbm [shape: bf16[128,128], index: 2, kind: input, shape index: {}]
  %s3 = inlined_call_operand.vmem [shape: f32[1,128], index: 3, kind: input, shape index: {}]
  %s4 = inlined_call_operand.hbm [shape: bf16[128,128], index: 4, kind: input, shape index: {}]
  %s5 = inlined_call_operand.vmem [shape: f32[1,128], index: 5, kind: input, shape index: {}]
  %s6 = inlined_call_operand.hbm [shape: bf16[128,128], index: 6, kind: input, shape index: {}]
  %s7 = inlined_call_operand.vmem [shape: f32[1,128], index: 7, kind: input, shape index: {}]
  %s8 = inlined_call_operand.hbm [shape: f32[512,128], index: 8, kind: output, shape index: {}]
  %s9 = sld [smem:[#allocation0]]
  $region85: #{tpu_custom_call.1} parent=0
    _
  %s11 = ssub.s32 1, %s9
  %s12 = scalar_select 0, %s11, %s9
  $region1: #{tpu_custom_call.1} parent=0
    #allocation2 [shape = 'u8[262144]{0}', space=vmem, size = 0x40000, scoped, tag = 'input window, operand 0']
    #allocation3 [shape = 's32[2]{0}', space=sflag, size = 0x8, scoped, tag = 'scoped memory for tpu_custom_call.1']
    #allocation4 [shape = 's32[2]{0}', space=sflag, size = 0x8, scoped, tag = 'scoped memory for tpu_custom_call.1']
    #allocation5 [shape = 'u8[512]{0}', space=vmem, size = 0x400, scoped, tag = 'input window, operand 1, single buffered']
    #allocation6 [shape = 's32[1]{0}', space=sflag, size = 0x4, scoped, tag = 'scoped memory for tpu_custom_call.1']
    #allocation7 [shape = 'u8[32768]{0}', space=vmem, size = 0x8000, scoped, tag = 'input window, operand 2, single buffered']
    #allocation8 [shape = 'u8[32768]{0}', space=vmem, size = 0x8000, scoped, tag = 'input window, operand 4, single buffered']
    #allocation9 [shape = 's32[1]{0}', space=sflag, size = 0x4, scoped, tag = 'scoped memory for tpu_custom_call.1']
    #allocation10 [shape = 'u8[32768]{0}', space=vmem, size = 0x8000, scoped, tag = 'input window, operand 6, single buffered']
    #allocation11 [shape = 'u8[262144]{0}', space=vmem, size = 0x40000, scoped, tag = 'output window, operand 0']
    %13 = vsyncpa [#allocation3], 0
    %s14 = scalar_lea.sflag [#allocation3], 1
    %15 = vsyncpa %s14, 0
    %16 = vsyncpa [#allocation6], 0
    %17 = vsyncpa [#allocation9], 0
    %18 = vsyncpa [#allocation4], 0
    %s19 = scalar_lea.sflag [#allocation4], 1
    %20 = vsyncpa %s19, 0
    loop: start=0, step=1, limit=4
    $region2: #{tpu_custom_call.1} parent=1 // loop_pre_header
      _
    $region3: #{tpu_custom_call.1} parent=1 // loop_header
      %s22 = sphi 0, %s26
      %p23 = scmp.ge.s32.totalorder %s22, 4
      %s32 = sphi 0, %s34
      %s35 = sphi 0, %s32
      %s36 = sphi 0, %s35
      %s52 = sphi 0, %s36
      %s56 = sphi 0, %s56
      %s58 = sphi 0, %s56
      %s59 = sphi 0, %s58
      %s73 = sphi 0, %s59
      %s77 = sphi 0, %s77
      %s79 = sphi 0, %s77
      %s80 = sphi 0, %s79
      %s94 = sphi 0, %s80
      %s98 = sphi 0, %s98
      %s100 = sphi 0, %s98
      %s101 = sphi 0, %s100
      %s115 = sphi 0, %s101
      %s119 = sphi 0, %s119
      %s121 = sphi 0, %s119
      %s122 = sphi 0, %s121
      %s136 = sphi 0, %s122
      %s140 = sphi 0, %s140
      %s142 = sphi 0, %s140
      %s143 = sphi 0, %s142
      %s157 = sphi 0, %s143
      %s161 = sphi 0, %s161
      %s163 = sphi 0, %s161
      %s164 = sphi 0, %s163
      %s178 = sphi 0, %s164
      %s182 = sphi 0, %s182
      %s184 = sphi 0, %s182
      %s185 = sphi 0, %s184
      %s199 = sphi 0, %s185
      %s205 = sphi 0, %s207
      %s208 = sphi 0, %s205
      %s209 = sphi 0, %s208
      %s225 = sphi 0, %s209
    $region4: #{tpu_custom_call.1} parent=1 // loop_header_branch
      %25 = sbr.rel (%p23) target = $region8
    $region5: #{tpu_custom_call.1} parent=1 // loop_body
      %s27 = ssub.s32 %s22, 1
      %s28 = ssub.s32 %s22, 2
      %s29 = sadd.s32 %s22, 1
      %s30 = ssub.s32 %s22, %s29
      %p31 = scmp.eq.s32.totalorder %s30, 0
      %s33 = sadd.s32 %s32, 1
      %s34 = scalar_select %p31, %s32, %s33
      %p37 = pneg %p31
      %p38 = scmp.eq.s32.totalorder %s22, 1
      %p39 = por %p37, %p38
      %p40 = scmp.ne.s32.totalorder %s32, %s35
      %p41 = scmp.eq.s32.totalorder %s22, 0
      %p42 = por %p40, %p41
      %p43 = scmp.ne.s32.totalorder %s32, %s35
      %p44 = scmp.eq.s32.totalorder %s27, 1
      %p45 = por %p43, %p44
      %p46 = scmp.ne.s32.totalorder %s35, %s36
      %p47 = scmp.eq.s32.totalorder %s27, 0
      %p48 = por %p46, %p47
      %p49 = scmp.ne.s32.totalorder %s35, %s36
      %p50 = scmp.eq.s32.totalorder %s28, 1
      %p51 = por %p49, %p50
      %p53 = scmp.ne.s32.totalorder %s36, %s52
      %p54 = scmp.eq.s32.totalorder %s28, 0
      %p55 = por %p53, %p54
      %s57 = sadd.s32 %s56, 1
      %p60 = scmp.eq.s32.totalorder %s22, 1
      %p61 = scmp.ne.s32.totalorder %s56, %s58
      %p62 = scmp.eq.s32.totalorder %s22, 0
      %p63 = por %p61, %p62
      %p64 = scmp.ne.s32.totalorder %s56, %s58
      %p65 = scmp.eq.s32.totalorder %s27, 1
      %p66 = por %p64, %p65
      %p67 = scmp.ne.s32.totalorder %s58, %s59
      %p68 = scmp.eq.s32.totalorder %s27, 0
      %p69 = por %p67, %p68
      %p70 = scmp.ne.s32.totalorder %s58, %s59
      %p71 = scmp.eq.s32.totalorder %s28, 1
      %p72 = por %p70, %p71
      %p74 = scmp.ne.s32.totalorder %s59, %s73
      %p75 = scmp.eq.s32.totalorder %s28, 0
      %p76 = por %p74, %p75
      %s78 = sadd.s32 %s77, 1
      %p81 = scmp.eq.s32.totalorder %s22, 1
      %p82 = scmp.ne.s32.totalorder %s77, %s79
      %p83 = scmp.eq.s32.totalorder %s22, 0
      %p84 = por %p82, %p83
      %p85 = scmp.ne.s32.totalorder %s77, %s79
      %p86 = scmp.eq.s32.totalorder %s27, 1
      %p87 = por %p85, %p86
      %p88 = scmp.ne.s32.totalorder %s79, %s80
      %p89 = scmp.eq.s32.totalorder %s27, 0
      %p90 = por %p88, %p89
      %p91 = scmp.ne.s32.totalorder %s79, %s80
      %p92 = scmp.eq.s32.totalorder %s28, 1
      %p93 = por %p91, %p92
      %p95 = scmp.ne.s32.totalorder %s80, %s94
      %p96 = scmp.eq.s32.totalorder %s28, 0
      %p97 = por %p95, %p96
      %s99 = sadd.s32 %s98, 1
      %p102 = scmp.eq.s32.totalorder %s22, 1
      %p103 = scmp.ne.s32.totalorder %s98, %s100
      %p104 = scmp.eq.s32.totalorder %s22, 0
      %p105 = por %p103, %p104
      %p106 = scmp.ne.s32.totalorder %s98, %s100
      %p107 = scmp.eq.s32.totalorder %s27, 1
      %p108 = por %p106, %p107
      %p109 = scmp.ne.s32.totalorder %s100, %s101
      %p110 = scmp.eq.s32.totalorder %s27, 0
      %p111 = por %p109, %p110
      %p112 = scmp.ne.s32.totalorder %s100, %s101
      %p113 = scmp.eq.s32.totalorder %s28, 1
      %p114 = por %p112, %p113
      %p116 = scmp.ne.s32.totalorder %s101, %s115
      %p117 = scmp.eq.s32.totalorder %s28, 0
      %p118 = por %p116, %p117
      %s120 = sadd.s32 %s119, 1
      %p123 = scmp.eq.s32.totalorder %s22, 1
      %p124 = scmp.ne.s32.totalorder %s119, %s121
      %p125 = scmp.eq.s32.totalorder %s22, 0
      %p126 = por %p124, %p125
      %p127 = scmp.ne.s32.totalorder %s119, %s121
      %p128 = scmp.eq.s32.totalorder %s27, 1
      %p129 = por %p127, %p128
      %p130 = scmp.ne.s32.totalorder %s121, %s122
      %p131 = scmp.eq.s32.totalorder %s27, 0
      %p132 = por %p130, %p131
      %p133 = scmp.ne.s32.totalorder %s121, %s122
      %p134 = scmp.eq.s32.totalorder %s28, 1
      %p135 = por %p133, %p134
      %p137 = scmp.ne.s32.totalorder %s122, %s136
      %p138 = scmp.eq.s32.totalorder %s28, 0
      %p139 = por %p137, %p138
      %s141 = sadd.s32 %s140, 1
      %p144 = scmp.eq.s32.totalorder %s22, 1
      %p145 = scmp.ne.s32.totalorder %s140, %s142
      %p146 = scmp.eq.s32.totalorder %s22, 0
      %p147 = por %p145, %p146
      %p148 = scmp.ne.s32.totalorder %s140, %s142
      %p149 = scmp.eq.s32.totalorder %s27, 1
      %p150 = por %p148, %p149
      %p151 = scmp.ne.s32.totalorder %s142, %s143
      %p152 = scmp.eq.s32.totalorder %s27, 0
      %p153 = por %p151, %p152
      %p154 = scmp.ne.s32.totalorder %s142, %s143
      %p155 = scmp.eq.s32.totalorder %s28, 1
      %p156 = por %p154, %p155
      %p158 = scmp.ne.s32.totalorder %s143, %s157
      %p159 = scmp.eq.s32.totalorder %s28, 0
      %p160 = por %p158, %p159
      %s162 = sadd.s32 %s161, 1
      %p165 = scmp.eq.s32.totalorder %s22, 1
      %p166 = scmp.ne.s32.totalorder %s161, %s163
      %p167 = scmp.eq.s32.totalorder %s22, 0
      %p168 = por %p166, %p167
      %p169 = scmp.ne.s32.totalorder %s161, %s163
      %p170 = scmp.eq.s32.totalorder %s27, 1
      %p171 = por %p169, %p170
      %p172 = scmp.ne.s32.totalorder %s163, %s164
      %p173 = scmp.eq.s32.totalorder %s27, 0
      %p174 = por %p172, %p173
      %p175 = scmp.ne.s32.totalorder %s163, %s164
      %p176 = scmp.eq.s32.totalorder %s28, 1
      %p177 = por %p175, %p176
      %p179 = scmp.ne.s32.totalorder %s164, %s178
      %p180 = scmp.eq.s32.totalorder %s28, 0
      %p181 = por %p179, %p180
      %s183 = sadd.s32 %s182, 1
      %p186 = scmp.eq.s32.totalorder %s22, 1
      %p187 = scmp.ne.s32.totalorder %s182, %s184
      %p188 = scmp.eq.s32.totalorder %s22, 0
      %p189 = por %p187, %p188
      %p190 = scmp.ne.s32.totalorder %s182, %s184
      %p191 = scmp.eq.s32.totalorder %s27, 1
      %p192 = por %p190, %p191
      %p193 = scmp.ne.s32.totalorder %s184, %s185
      %p194 = scmp.eq.s32.totalorder %s27, 0
      %p195 = por %p193, %p194
      %p196 = scmp.ne.s32.totalorder %s184, %s185
      %p197 = scmp.eq.s32.totalorder %s28, 1
      %p198 = por %p196, %p197
      %p200 = scmp.ne.s32.totalorder %s185, %s199
      %p201 = scmp.eq.s32.totalorder %s28, 0
      %p202 = por %p200, %p201
      %s203 = ssub.s32 %s22, %s29
      %p204 = scmp.eq.s32.totalorder %s203, 0
      %s206 = sadd.s32 %s205, 1
      %s207 = scalar_select %p204, %s205, %s206
      %p210 = pneg %p204
      %p211 = scmp.eq.s32.totalorder %s22, 1
      %p212 = por %p210, %p211
      %p213 = scmp.ne.s32.totalorder %s205, %s208
      %p214 = scmp.eq.s32.totalorder %s22, 0
      %p215 = por %p213, %p214
      %p216 = scmp.ne.s32.totalorder %s205, %s208
      %p217 = scmp.eq.s32.totalorder %s27, 1
      %p218 = por %p216, %p217
      %p219 = scmp.ne.s32.totalorder %s208, %s209
      %p220 = scmp.eq.s32.totalorder %s27, 0
      %p221 = por %p219, %p220
      %p222 = scmp.ne.s32.totalorder %s208, %s209
      %p223 = scmp.eq.s32.totalorder %s28, 1
      %p224 = por %p222, %p223
      %p226 = scmp.ne.s32.totalorder %s209, %s225
      %p227 = scmp.eq.s32.totalorder %s28, 0
      %p228 = por %p226, %p227
      %p229 = scmp.le.s32.totalorder 1, %s22
      %p230 = scmp.lt.s32.totalorder %s22, 3
      %p231 = pnand %p229, %p230
      %p232 = pneg %p231
      // Predicated region
      $region9: #{tpu_custom_call.1} parent=5 // pred_check
        _
      $region10: #{tpu_custom_call.1} parent=5 // pred_check_branch
        %234 = sbr.rel (%p231) target = $region12
      $region11: #{tpu_custom_call.1} parent=5 // pred_region
        %s235 = ssub.s32 %s22, 1
        // Predicated region
        $region13: #{tpu_custom_call.1} parent=11 // pred_check
          %p236 = pneg %p69
        $region14: #{tpu_custom_call.1} parent=11 // pred_check_branch
          %238 = sbr.rel (%p236) target = $region16
        $region15: #{tpu_custom_call.1} parent=11 // pred_region
          %240 = vsyncadd [#allocation6], 0
          %s242 = sshll.u32 %s1, 4
          %s243 = int_to_ptr.hbm [resolvable:$true] %s242
          %s244 = sshll.u32 [#allocation5], 4
          %s245 = int_to_ptr.vmem [resolvable:$true] %s244
          %247 = dma.hbm_to_vmem [thread:$0]  %s243, 16, %s245, [#allocation6]
        $region16: #{tpu_custom_call.1} parent=11 // pred_fallthru
          _
        // Predicated region
        $region17: #{tpu_custom_call.1} parent=11 // pred_check
          %p248 = pneg %p90
        $region18: #{tpu_custom_call.1} parent=11 // pred_check_branch
          %250 = sbr.rel (%p248) target = $region20
        $region19: #{tpu_custom_call.1} parent=11 // pred_region
          %252 = vsyncadd [#allocation6], 0
          %s253 = sshll.u32 %s2, 4
          %s254 = int_to_ptr.hbm [resolvable:$true] %s253
          %s255 = sshll.u32 [#allocation7], 4
          %s256 = int_to_ptr.vmem [resolvable:$true] %s255
          %261 = dma.hbm_to_vmem [thread:$0]  %s254, 1024, %s256, [#allocation6], 64, 64, 4
        $region20: #{tpu_custom_call.1} parent=11 // pred_fallthru
          _
        // Predicated region
        $region21: #{tpu_custom_call.1} parent=11 // pred_check
          %p262 = pneg %p111
        $region22: #{tpu_custom_call.1} parent=11 // pred_check_branch
          %264 = sbr.rel (%p262) target = $region24
        $region23: #{tpu_custom_call.1} parent=11 // pred_region
          _
        $region24: #{tpu_custom_call.1} parent=11 // pred_fallthru
          _
        // Predicated region
        $region25: #{tpu_custom_call.1} parent=11 // pred_check
          %p265 = pneg %p132
        $region26: #{tpu_custom_call.1} parent=11 // pred_check_branch
          %267 = sbr.rel (%p265) target = $region28
        $region27: #{tpu_custom_call.1} parent=11 // pred_region
          %269 = vsyncadd [#allocation9], 0
          %s270 = sshll.u32 %s4, 4
          %s271 = int_to_ptr.hbm [resolvable:$true] %s270
          %s272 = sshll.u32 [#allocation8], 4
          %s273 = int_to_ptr.vmem [resolvable:$true] %s272
          %278 = dma.hbm_to_vmem [thread:$0]  %s271, 1024, %s273, [#allocation9], 64, 64, 4
        $region28: #{tpu_custom_call.1} parent=11 // pred_fallthru
          _
        // Predicated region
        $region29: #{tpu_custom_call.1} parent=11 // pred_check
          %p279 = pneg %p153
        $region30: #{tpu_custom_call.1} parent=11 // pred_check_branch
          %281 = sbr.rel (%p279) target = $region32
        $region31: #{tpu_custom_call.1} parent=11 // pred_region
          _
        $region32: #{tpu_custom_call.1} parent=11 // pred_fallthru
          _
        // Predicated region
        $region33: #{tpu_custom_call.1} parent=11 // pred_check
          %p282 = pneg %p174
        $region34: #{tpu_custom_call.1} parent=11 // pred_check_branch
          %284 = sbr.rel (%p282) target = $region36
        $region35: #{tpu_custom_call.1} parent=11 // pred_region
          %286 = vsyncadd [#allocation9], 0
          %s287 = sshll.u32 %s6, 4
          %s288 = int_to_ptr.hbm [resolvable:$true] %s287
          %s289 = sshll.u32 [#allocation10], 4
          %s290 = int_to_ptr.vmem [resolvable:$true] %s289
          %295 = dma.hbm_to_vmem [thread:$0]  %s288, 1024, %s290, [#allocation9], 64, 64, 4
        $region36: #{tpu_custom_call.1} parent=11 // pred_fallthru
          _
        // Predicated region
        $region37: #{tpu_custom_call.1} parent=11 // pred_check
          %p296 = pneg %p195
        $region38: #{tpu_custom_call.1} parent=11 // pred_check_branch
          %298 = sbr.rel (%p296) target = $region40
        $region39: #{tpu_custom_call.1} parent=11 // pred_region
          _
        $region40: #{tpu_custom_call.1} parent=11 // pred_fallthru
          _
      $region12: #{tpu_custom_call.1} parent=5 // pred_fallthru
        _
      %p299 = scmp.lt.s32.totalorder %s22, 2
      // Predicated region
      $region41: #{tpu_custom_call.1} parent=5 // pred_check
        %p300 = pneg %p299
      $region42: #{tpu_custom_call.1} parent=5 // pred_check_branch
        %302 = sbr.rel (%p300) target = $region44
      $region43: #{tpu_custom_call.1} parent=5 // pred_region
        // Predicated region
        $region45: #{tpu_custom_call.1} parent=43 // pred_check
          %p303 = pneg %p42
        $region46: #{tpu_custom_call.1} parent=43 // pred_check_branch
          %305 = sbr.rel (%p303) target = $region48
        $region47: #{tpu_custom_call.1} parent=43 // pred_region
          %s306 = sand.u32 %s32, 1
          %s307 = scalar_lea.sflag [#allocation3], %s306
          %s308 = sand.u32 %s32, 1
          %s309 = smul.addr %s308, 256
          %s310 = scalar_lea.vmem [#allocation2], %s309
          %s311 = smul.u32 32, %s22
          %313 = vsyncadd %s307, 0
          %s314 = smul.addr %s311, 8
          %s315 = scalar_lea.hbm %s0, %s314
          %s316 = sshll.u32 %s315, 4
          %s317 = int_to_ptr.hbm [resolvable:$true] %s316
          %s318 = sshll.u32 %s310, 4
          %s319 = int_to_ptr.vmem [resolvable:$true] %s318
          %324 = dma.hbm_to_vmem [thread:$0]  %s317, 4096, %s319, %s307, 128, 128, 8
        $region48: #{tpu_custom_call.1} parent=43 // pred_fallthru
          _
      $region44: #{tpu_custom_call.1} parent=5 // pred_fallthru
        _
      %p325 = scmp.le.s32.totalorder 1, %s22
      %p326 = scmp.lt.s32.totalorder %s22, 3
      %p327 = pnand %p325, %p326
      %p328 = pneg %p327
      // Predicated region
      $region49: #{tpu_custom_call.1} parent=5 // pred_check
        _
      $region50: #{tpu_custom_call.1} parent=5 // pred_check_branch
        %330 = sbr.rel (%p327) target = $region52
      $region51: #{tpu_custom_call.1} parent=5 // pred_region
        %s331 = ssub.s32 %s22, 1
        %s332 = sand.u32 %s35, 1
        %s333 = scalar_lea.sflag [#allocation3], %s332
        %s334 = sand.u32 %s35, 1
        %s335 = smul.addr %s334, 256
        %s336 = scalar_lea.vmem [#allocation2], %s335
        // Predicated region
        $region53: #{tpu_custom_call.1} parent=51 // pred_check
          %p337 = pneg %p48
        $region54: #{tpu_custom_call.1} parent=51 // pred_check_branch
          %339 = sbr.rel (%p337) target = $region56
        $region55: #{tpu_custom_call.1} parent=51 // pred_region
          %341 = dma.done %s333, 4096
        $region56: #{tpu_custom_call.1} parent=51 // pred_fallthru
          _
        // Predicated region
        $region57: #{tpu_custom_call.1} parent=51 // pred_check
          %p342 = pneg %p69
        $region58: #{tpu_custom_call.1} parent=51 // pred_check_branch
          %344 = sbr.rel (%p342) target = $region60
        $region59: #{tpu_custom_call.1} parent=51 // pred_region
          %346 = dma.done [#allocation6], 16
        $region60: #{tpu_custom_call.1} parent=51 // pred_fallthru
          _
        // Predicated region
        $region61: #{tpu_custom_call.1} parent=51 // pred_check
          %p347 = pneg %p90
        $region62: #{tpu_custom_call.1} parent=51 // pred_check_branch
          %349 = sbr.rel (%p347) target = $region64
        $region63: #{tpu_custom_call.1} parent=51 // pred_region
          %351 = dma.done [#allocation6], 1024
        $region64: #{tpu_custom_call.1} parent=51 // pred_fallthru
          _
        // Predicated region
        $region65: #{tpu_custom_call.1} parent=51 // pred_check
          %p352 = pneg %p132
        $region66: #{tpu_custom_call.1} parent=51 // pred_check_branch
          %354 = sbr.rel (%p352) target = $region68
        $region67: #{tpu_custom_call.1} parent=51 // pred_region
          %356 = dma.done [#allocation9], 1024
        $region68: #{tpu_custom_call.1} parent=51 // pred_fallthru
          _
        // Predicated region
        $region69: #{tpu_custom_call.1} parent=51 // pred_check
          %p357 = pneg %p174
        $region70: #{tpu_custom_call.1} parent=51 // pred_check_branch
          %359 = sbr.rel (%p357) target = $region72
        $region71: #{tpu_custom_call.1} parent=51 // pred_region
          %361 = dma.done [#allocation9], 1024
        $region72: #{tpu_custom_call.1} parent=51 // pred_fallthru
          _
        %s362 = sand.u32 %s35, 1
        %s363 = scalar_lea.sflag [#allocation3], %s362
        %s364 = sand.u32 %s35, 1
        %s365 = smul.addr %s364, 256
        %s366 = scalar_lea.vmem [#allocation2], %s365
        %p367 = pneg %p48
        %p368 = pneg %p45
        %p369 = pneg %p69
        %p370 = pneg %p66
        %p371 = pneg %p90
        %p372 = pneg %p87
        %p373 = pneg %p111
        %p374 = pneg %p108
        %p375 = pneg %p132
        %p376 = pneg %p129
        %p377 = pneg %p153
        %p378 = pneg %p150
        %p379 = pneg %p174
        %p380 = pneg %p171
        %p381 = pneg %p195
        %p382 = pneg %p192
        %p383 = pneg %p221
        %p384 = pneg %p218
        %s385 = sand.u32 %s208, 1
        %s386 = scalar_lea.sflag [#allocation4], %s385
        %s387 = sand.u32 %s208, 1
        %s388 = smul.addr %s387, 256
        %s389 = scalar_lea.vmem [#allocation11], %s388
        %s390 = smul.u32 32, %s27
        %s391 = smul.u32 32, %s27
        %v392 = vld [vmem:[#allocation5] sm:$0x1]
        %v393 = vxor.u32 %v392, 2147483648
        %v394 = vmul.f32 %v393, 1.442695
        %v395 = vpow.pop %v394
        %v396 = vadd.f32 %v395, 1.0
        %v397 = vrcp.pop %v396
        %v398 = vmul.f32 %v396, %v397
        %v399 = vsub.f32 1.0, %v398
        %v400 = vmul.f32 %v397, %v399
        %v401 = vadd.f32 %v397, %v400
        %vm402 = vweird.f32 %v396
        %vm403 = vweird.f32 %v397
        %vm404 = vmor %vm402, %vm403
        %v405 = vsel %vm404, %v397, %v401
        %v406 = vand.u32 2147483647, %v396
        %vm407 = vcmp.eq.f32.partialorder %v406, 8.507059e+37
        %v408 = vand.u32 %v396, 2147483648
        %v409 = vor.u32 1.1754944e-38, %v408
        %v410 = vsel %vm407, %v409, %v405
        %v411 = vmul.f32 1.0, %v410
        %v412 = vld [vmem:[%s336] sm:$0xff]
        %v413 = vld [vmem:[%s336 + $0x8] sm:$0xff]
        %v414 = vld [vmem:[%s336 + $0x10] sm:$0xff]
        %v415 = vld [vmem:[%s336 + $0x18] sm:$0xff]
        %v416 = vld [vmem:[%s336 + $0x20] sm:$0xff]
        %v417 = vld [vmem:[%s336 + $0x28] sm:$0xff]
        %v418 = vld [vmem:[%s336 + $0x30] sm:$0xff]
        %v419 = vld [vmem:[%s336 + $0x38] sm:$0xff]
        %v420 = vld [vmem:[%s336 + $0x40] sm:$0xff]
        %v421 = vld [vmem:[%s336 + $0x48] sm:$0xff]
        %v422 = vld [vmem:[%s336 + $0x50] sm:$0xff]
        %v423 = vld [vmem:[%s336 + $0x58] sm:$0xff]
        %v424 = vld [vmem:[%s336 + $0x60] sm:$0xff]
        %v425 = vld [vmem:[%s336 + $0x68] sm:$0xff]
        %v426 = vld [vmem:[%s336 + $0x70] sm:$0xff]
        %v427 = vld [vmem:[%s336 + $0x78] sm:$0xff]
        %v428 = vld [vmem:[%s336 + $0x80] sm:$0xff]
        %v429 = vld [vmem:[%s336 + $0x88] sm:$0xff]
        %v430 = vld [vmem:[%s336 + $0x90] sm:$0xff]
        %v431 = vld [vmem:[%s336 + $0x98] sm:$0xff]
        %v432 = vld [vmem:[%s336 + $0xa0] sm:$0xff]
        %v433 = vld [vmem:[%s336 + $0xa8] sm:$0xff]
        %v434 = vld [vmem:[%s336 + $0xb0] sm:$0xff]
        %v435 = vld [vmem:[%s336 + $0xb8] sm:$0xff]
        %v436 = vld [vmem:[%s336 + $0xc0] sm:$0xff]
        %v437 = vld [vmem:[%s336 + $0xc8] sm:$0xff]
        %v438 = vld [vmem:[%s336 + $0xd0] sm:$0xff]
        %v439 = vld [vmem:[%s336 + $0xd8] sm:$0xff]
        %v440 = vld [vmem:[%s336 + $0xe0] sm:$0xff]
        %v441 = vld [vmem:[%s336 + $0xe8] sm:$0xff]
        %v442 = vld [vmem:[%s336 + $0xf0] sm:$0xff]
        %v443 = vld [vmem:[%s336 + $0xf8] sm:$0xff]
        %v445 = vperm.slane %v411, 0
        %v447 = vmul.f32 %v412, %v445
        %v448 = vmul.f32 %v413, %v445
        %v449 = vmul.f32 %v414, %v445
        %v450 = vmul.f32 %v415, %v445
        %v451 = vmul.f32 %v416, %v445
        %v452 = vmul.f32 %v417, %v445
        %v453 = vmul.f32 %v418, %v445
        %v454 = vmul.f32 %v419, %v445
        %v455 = vmul.f32 %v420, %v445
        %v456 = vmul.f32 %v421, %v445
        %v457 = vmul.f32 %v422, %v445
        %v458 = vmul.f32 %v423, %v445
        %v459 = vmul.f32 %v424, %v445
        %v460 = vmul.f32 %v425, %v445
        %v461 = vmul.f32 %v426, %v445
        %v462 = vmul.f32 %v427, %v445
        %v463 = vmul.f32 %v428, %v445
        %v464 = vmul.f32 %v429, %v445
        %v465 = vmul.f32 %v430, %v445
        %v466 = vmul.f32 %v431, %v445
        %v467 = vmul.f32 %v432, %v445
        %v468 = vmul.f32 %v433, %v445
        %v469 = vmul.f32 %v434, %v445
        %v470 = vmul.f32 %v435, %v445
        %v471 = vmul.f32 %v436, %v445
        %v472 = vmul.f32 %v437, %v445
        %v473 = vmul.f32 %v438, %v445
        %v474 = vmul.f32 %v439, %v445
        %v475 = vmul.f32 %v440, %v445
        %v476 = vmul.f32 %v441, %v445
        %v477 = vmul.f32 %v442, %v445
        %v478 = vmul.f32 %v443, %v445
        %v479 = vpack.c.bf16 %v448, %v447
        %v480 = vpack.c.bf16 %v450, %v449
        %v481 = vpack.c.bf16 %v452, %v451
        %v482 = vpack.c.bf16 %v454, %v453
        %v483 = vpack.c.bf16 %v456, %v455
        %v484 = vpack.c.bf16 %v458, %v457
        %v485 = vpack.c.bf16 %v460, %v459
        %v486 = vpack.c.bf16 %v462, %v461
        %v487 = vpack.c.bf16 %v464, %v463
        %v488 = vpack.c.bf16 %v466, %v465
        %v489 = vpack.c.bf16 %v468, %v467
        %v490 = vpack.c.bf16 %v470, %v469
        %v491 = vpack.c.bf16 %v472, %v471
        %v492 = vpack.c.bf16 %v474, %v473
        %v493 = vpack.c.bf16 %v476, %v475
        %v494 = vpack.c.bf16 %v478, %v477
        %v495 = vld [vmem:[#allocation7] sm:$0xf]
        %v496 = vld [vmem:[#allocation7 + $0x4] sm:$0xf]
        %v497 = vld [vmem:[#allocation7 + $0x8] sm:$0xf]
        %v498 = vld [vmem:[#allocation7 + $0xc] sm:$0xf]
        %v499 = vld [vmem:[#allocation7 + $0x10] sm:$0xf]
        %v500 = vld [vmem:[#allocation7 + $0x14] sm:$0xf]
        %v501 = vld [vmem:[#allocation7 + $0x18] sm:$0xf]
        %v502 = vld [vmem:[#allocation7 + $0x1c] sm:$0xf]
        %v503 = vld [vmem:[#allocation7 + $0x20] sm:$0xf]
        %v504 = vld [vmem:[#allocation7 + $0x24] sm:$0xf]
        %v505 = vld [vmem:[#allocation7 + $0x28] sm:$0xf]
        %v506 = vld [vmem:[#allocation7 + $0x2c] sm:$0xf]
        %v507 = vld [vmem:[#allocation7 + $0x30] sm:$0xf]
        %v508 = vld [vmem:[#allocation7 + $0x34] sm:$0xf]
        %v509 = vld [vmem:[#allocation7 + $0x38] sm:$0xf]
        %v510 = vld [vmem:[#allocation7 + $0x3c] sm:$0xf]
        %v511 = vld [vmem:[%s3] sm:$0x1]
        %v513 = vperm.slane %v511, 0
        %v531 = vunpack.c.l.b16 %v495
        %v532 = vunpack.c.l.b16 %v496
        %v533 = vunpack.c.l.b16 %v497
        %v534 = vunpack.c.l.b16 %v498
        %v535 = vunpack.c.l.b16 %v499
        %v536 = vunpack.c.l.b16 %v500
        %v537 = vunpack.c.l.b16 %v501
        %v538 = vunpack.c.l.b16 %v502
        %v539 = vunpack.c.l.b16 %v503
        %v540 = vunpack.c.l.b16 %v504
        %v541 = vunpack.c.l.b16 %v505
        %v542 = vunpack.c.l.b16 %v506
        %v543 = vunpack.c.l.b16 %v507
        %v544 = vunpack.c.l.b16 %v508
        %v545 = vunpack.c.l.b16 %v509
        %v546 = vunpack.c.l.b16 %v510
        %v547 = vpack.c.b16 %v532, %v531
        %v548 = vpack.c.b16 %v534, %v533
        %v549 = vpack.c.b16 %v536, %v535
        %v550 = vpack.c.b16 %v538, %v537
        %v551 = vpack.c.b16 %v540, %v539
        %v552 = vpack.c.b16 %v542, %v541
        %v553 = vpack.c.b16 %v544, %v543
        %v554 = vpack.c.b16 %v546, %v545
        %563 = vmatpush.bf16.msra.mxu0 %v554
        %564 = vmatpush.bf16.msra.mxu0 %v553
        %565 = vmatpush.bf16.msra.mxu0 %v552
        %566 = vmatpush.bf16.msra.mxu0 %v551
        %567 = vmatpush.bf16.msra.mxu0 %v550
        %568 = vmatpush.bf16.msra.mxu0 %v549
        %569 = vmatpush.bf16.msra.mxu0 %v548
        %570 = vmatpush.bf16.msra.mxu0 %v547
        %571 = vmatmul.bf16.gmra.mxu0 %v479
        %v572 = vpop.f32.mrf.mxu0
        %v573 = vadd.f32 %v513, %v572
        %v574 = vpop.f32.mrf.mxu0
        %v575 = vadd.f32 %v513, %v574
        %576 = vmatmul.bf16.gmra.mxu0 %v480
        %v577 = vpop.f32.mrf.mxu0
        %v578 = vadd.f32 %v513, %v577
        %v579 = vpop.f32.mrf.mxu0
        %v580 = vadd.f32 %v513, %v579
        %581 = vmatmul.bf16.gmra.mxu0 %v481
        %v582 = vpop.f32.mrf.mxu0
        %v583 = vadd.f32 %v513, %v582
        %v584 = vpop.f32.mrf.mxu0
        %v585 = vadd.f32 %v513, %v584
        %586 = vmatmul.bf16.gmra.mxu0 %v482
        %v587 = vpop.f32.mrf.mxu0
        %v588 = vadd.f32 %v513, %v587
        %v589 = vpop.f32.mrf.mxu0
        %v590 = vadd.f32 %v513, %v589
        %591 = vmatmul.bf16.gmra.mxu0 %v483
        %v592 = vpop.f32.mrf.mxu0
        %v593 = vadd.f32 %v513, %v592
        %v594 = vpop.f32.mrf.mxu0
        %v595 = vadd.f32 %v513, %v594
        %596 = vmatmul.bf16.gmra.mxu0 %v484
        %v597 = vpop.f32.mrf.mxu0
        %v598 = vadd.f32 %v513, %v597
        %v599 = vpop.f32.mrf.mxu0
        %v600 = vadd.f32 %v513, %v599
        %601 = vmatmul.bf16.gmra.mxu0 %v485
        %v602 = vpop.f32.mrf.mxu0
        %v603 = vadd.f32 %v513, %v602
        %v604 = vpop.f32.mrf.mxu0
        %v605 = vadd.f32 %v513, %v604
        %606 = vmatmul.bf16.gmra.mxu0 %v486
        %v607 = vpop.f32.mrf.mxu0
        %v608 = vadd.f32 %v513, %v607
        %v609 = vpop.f32.mrf.mxu0
        %v610 = vadd.f32 %v513, %v609
        %611 = vmatmul.bf16.gmra.mxu0 %v487
        %v612 = vpop.f32.mrf.mxu0
        %v613 = vadd.f32 %v513, %v612
        %v614 = vpop.f32.mrf.mxu0
        %v615 = vadd.f32 %v513, %v614
        %616 = vmatmul.bf16.gmra.mxu0 %v488
        %v617 = vpop.f32.mrf.mxu0
        %v618 = vadd.f32 %v513, %v617
        %v619 = vpop.f32.mrf.mxu0
        %v620 = vadd.f32 %v513, %v619
        %621 = vmatmul.bf16.gmra.mxu0 %v489
        %v622 = vpop.f32.mrf.mxu0
        %v623 = vadd.f32 %v513, %v622
        %v624 = vpop.f32.mrf.mxu0
        %v625 = vadd.f32 %v513, %v624
        %626 = vmatmul.bf16.gmra.mxu0 %v490
        %v627 = vpop.f32.mrf.mxu0
        %v628 = vadd.f32 %v513, %v627
        %v629 = vpop.f32.mrf.mxu0
        %v630 = vadd.f32 %v513, %v629
        %631 = vmatmul.bf16.gmra.mxu0 %v491
        %v632 = vpop.f32.mrf.mxu0
        %v633 = vadd.f32 %v513, %v632
        %v634 = vpop.f32.mrf.mxu0
        %v635 = vadd.f32 %v513, %v634
        %636 = vmatmul.bf16.gmra.mxu0 %v492
        %v637 = vpop.f32.mrf.mxu0
        %v638 = vadd.f32 %v513, %v637
        %v639 = vpop.f32.mrf.mxu0
        %v640 = vadd.f32 %v513, %v639
        %641 = vmatmul.bf16.gmra.mxu0 %v493
        %v642 = vpop.f32.mrf.mxu0
        %v643 = vadd.f32 %v513, %v642
        %v644 = vpop.f32.mrf.mxu0
        %v645 = vadd.f32 %v513, %v644
        %646 = vmatmul.bf16.gmra.mxu0 %v494
        %v647 = vpop.f32.mrf.mxu0
        %v648 = vadd.f32 %v513, %v647
        %v649 = vpop.f32.mrf.mxu0
        %v650 = vadd.f32 %v513, %v649
        %651 = vdwg.mxu0
        %v652 = vmax.f32 %v573, 0.0
        %v653 = vmax.f32 %v575, 0.0
        %v654 = vmax.f32 %v578, 0.0
        %v655 = vmax.f32 %v580, 0.0
        %v656 = vmax.f32 %v583, 0.0
        %v657 = vmax.f32 %v585, 0.0
        %v658 = vmax.f32 %v588, 0.0
        %v659 = vmax.f32 %v590, 0.0
        %v660 = vmax.f32 %v593, 0.0
        %v661 = vmax.f32 %v595, 0.0
        %v662 = vmax.f32 %v598, 0.0
        %v663 = vmax.f32 %v600, 0.0
        %v664 = vmax.f32 %v603, 0.0
        %v665 = vmax.f32 %v605, 0.0
        %v666 = vmax.f32 %v608, 0.0
        %v667 = vmax.f32 %v610, 0.0
        %v668 = vmax.f32 %v613, 0.0
        %v669 = vmax.f32 %v615, 0.0
        %v670 = vmax.f32 %v618, 0.0
        %v671 = vmax.f32 %v620, 0.0
        %v672 = vmax.f32 %v623, 0.0
        %v673 = vmax.f32 %v625, 0.0
        %v674 = vmax.f32 %v628, 0.0
        %v675 = vmax.f32 %v630, 0.0
        %v676 = vmax.f32 %v633, 0.0
        %v677 = vmax.f32 %v635, 0.0
        %v678 = vmax.f32 %v638, 0.0
        %v679 = vmax.f32 %v640, 0.0
        %v680 = vmax.f32 %v643, 0.0
        %v681 = vmax.f32 %v645, 0.0
        %v682 = vmax.f32 %v648, 0.0
        %v683 = vmax.f32 %v650, 0.0
        %v684 = vpack.c.bf16 %v653, %v652
        %v685 = vpack.c.bf16 %v655, %v654
        %v686 = vpack.c.bf16 %v657, %v656
        %v687 = vpack.c.bf16 %v659, %v658
        %v688 = vpack.c.bf16 %v661, %v660
        %v689 = vpack.c.bf16 %v663, %v662
        %v690 = vpack.c.bf16 %v665, %v664
        %v691 = vpack.c.bf16 %v667, %v666
        %v692 = vpack.c.bf16 %v669, %v668
        %v693 = vpack.c.bf16 %v671, %v670
        %v694 = vpack.c.bf16 %v673, %v672
        %v695 = vpack.c.bf16 %v675, %v674
        %v696 = vpack.c.bf16 %v677, %v676
        %v697 = vpack.c.bf16 %v679, %v678
        %v698 = vpack.c.bf16 %v681, %v680
        %v699 = vpack.c.bf16 %v683, %v682
        %v700 = vld [vmem:[#allocation8] sm:$0xf]
        %v701 = vld [vmem:[#allocation8 + $0x4] sm:$0xf]
        %v702 = vld [vmem:[#allocation8 + $0x8] sm:$0xf]
        %v703 = vld [vmem:[#allocation8 + $0xc] sm:$0xf]
        %v704 = vld [vmem:[#allocation8 + $0x10] sm:$0xf]
        %v705 = vld [vmem:[#allocation8 + $0x14] sm:$0xf]
        %v706 = vld [vmem:[#allocation8 + $0x18] sm:$0xf]
        %v707 = vld [vmem:[#allocation8 + $0x1c] sm:$0xf]
        %v708 = vld [vmem:[#allocation8 + $0x20] sm:$0xf]
        %v709 = vld [vmem:[#allocation8 + $0x24] sm:$0xf]
        %v710 = vld [vmem:[#allocation8 + $0x28] sm:$0xf]
        %v711 = vld [vmem:[#allocation8 + $0x2c] sm:$0xf]
        %v712 = vld [vmem:[#allocation8 + $0x30] sm:$0xf]
        %v713 = vld [vmem:[#allocation8 + $0x34] sm:$0xf]
        %v714 = vld [vmem:[#allocation8 + $0x38] sm:$0xf]
        %v715 = vld [vmem:[#allocation8 + $0x3c] sm:$0xf]
        %v716 = vld [vmem:[%s5] sm:$0x1]
        %v718 = vperm.slane %v716, 0
        %v736 = vunpack.c.l.b16 %v700
        %v737 = vunpack.c.l.b16 %v701
        %v738 = vunpack.c.l.b16 %v702
        %v739 = vunpack.c.l.b16 %v703
        %v740 = vunpack.c.l.b16 %v704
        %v741 = vunpack.c.l.b16 %v705
        %v742 = vunpack.c.l.b16 %v706
        %v743 = vunpack.c.l.b16 %v707
        %v744 = vunpack.c.l.b16 %v708
        %v745 = vunpack.c.l.b16 %v709
        %v746 = vunpack.c.l.b16 %v710
        %v747 = vunpack.c.l.b16 %v711
        %v748 = vunpack.c.l.b16 %v712
        %v749 = vunpack.c.l.b16 %v713
        %v750 = vunpack.c.l.b16 %v714
        %v751 = vunpack.c.l.b16 %v715
        %v752 = vpack.c.b16 %v737, %v736
        %v753 = vpack.c.b16 %v739, %v738
        %v754 = vpack.c.b16 %v741, %v740
        %v755 = vpack.c.b16 %v743, %v742
        %v756 = vpack.c.b16 %v745, %v744
        %v757 = vpack.c.b16 %v747, %v746
        %v758 = vpack.c.b16 %v749, %v748
        %v759 = vpack.c.b16 %v751, %v750
        %768 = vmatpush.bf16.msra.mxu0 %v759
        %769 = vmatpush.bf16.msra.mxu0 %v758
        %770 = vmatpush.bf16.msra.mxu0 %v757
        %771 = vmatpush.bf16.msra.mxu0 %v756
        %772 = vmatpush.bf16.msra.mxu0 %v755
        %773 = vmatpush.bf16.msra.mxu0 %v754
        %774 = vmatpush.bf16.msra.mxu0 %v753
        %775 = vmatpush.bf16.msra.mxu0 %v752
        %776 = vmatmul.bf16.gmra.mxu0 %v684
        %v777 = vpop.f32.mrf.mxu0
        %v778 = vadd.f32 %v718, %v777
        %v779 = vpop.f32.mrf.mxu0
        %v780 = vadd.f32 %v718, %v779
        %781 = vmatmul.bf16.gmra.mxu0 %v685
        %v782 = vpop.f32.mrf.mxu0
        %v783 = vadd.f32 %v718, %v782
        %v784 = vpop.f32.mrf.mxu0
        %v785 = vadd.f32 %v718, %v784
        %786 = vmatmul.bf16.gmra.mxu0 %v686
        %v787 = vpop.f32.mrf.mxu0
        %v788 = vadd.f32 %v718, %v787
        %v789 = vpop.f32.mrf.mxu0
        %v790 = vadd.f32 %v718, %v789
        %791 = vmatmul.bf16.gmra.mxu0 %v687
        %v792 = vpop.f32.mrf.mxu0
        %v793 = vadd.f32 %v718, %v792
        %v794 = vpop.f32.mrf.mxu0
        %v795 = vadd.f32 %v718, %v794
        %796 = vmatmul.bf16.gmra.mxu0 %v688
        %v797 = vpop.f32.mrf.mxu0
        %v798 = vadd.f32 %v718, %v797
        %v799 = vpop.f32.mrf.mxu0
        %v800 = vadd.f32 %v718, %v799
        %801 = vmatmul.bf16.gmra.mxu0 %v689
        %v802 = vpop.f32.mrf.mxu0
        %v803 = vadd.f32 %v718, %v802
        %v804 = vpop.f32.mrf.mxu0
        %v805 = vadd.f32 %v718, %v804
        %806 = vmatmul.bf16.gmra.mxu0 %v690
        %v807 = vpop.f32.mrf.mxu0
        %v808 = vadd.f32 %v718, %v807
        %v809 = vpop.f32.mrf.mxu0
        %v810 = vadd.f32 %v718, %v809
        %811 = vmatmul.bf16.gmra.mxu0 %v691
        %v812 = vpop.f32.mrf.mxu0
        %v813 = vadd.f32 %v718, %v812
        %v814 = vpop.f32.mrf.mxu0
        %v815 = vadd.f32 %v718, %v814
        %816 = vmatmul.bf16.gmra.mxu0 %v692
        %v817 = vpop.f32.mrf.mxu0
        %v818 = vadd.f32 %v718, %v817
        %v819 = vpop.f32.mrf.mxu0
        %v820 = vadd.f32 %v718, %v819
        %821 = vmatmul.bf16.gmra.mxu0 %v693
        %v822 = vpop.f32.mrf.mxu0
        %v823 = vadd.f32 %v718, %v822
        %v824 = vpop.f32.mrf.mxu0
        %v825 = vadd.f32 %v718, %v824
        %826 = vmatmul.bf16.gmra.mxu0 %v694
        %v827 = vpop.f32.mrf.mxu0
        %v828 = vadd.f32 %v718, %v827
        %v829 = vpop.f32.mrf.mxu0
        %v830 = vadd.f32 %v718, %v829
        %831 = vmatmul.bf16.gmra.mxu0 %v695
        %v832 = vpop.f32.mrf.mxu0
        %v833 = vadd.f32 %v718, %v832
        %v834 = vpop.f32.mrf.mxu0
        %v835 = vadd.f32 %v718, %v834
        %836 = vmatmul.bf16.gmra.mxu0 %v696
        %v837 = vpop.f32.mrf.mxu0
        %v838 = vadd.f32 %v718, %v837
        %v839 = vpop.f32.mrf.mxu0
        %v840 = vadd.f32 %v718, %v839
        %841 = vmatmul.bf16.gmra.mxu0 %v697
        %v842 = vpop.f32.mrf.mxu0
        %v843 = vadd.f32 %v718, %v842
        %v844 = vpop.f32.mrf.mxu0
        %v845 = vadd.f32 %v718, %v844
        %846 = vmatmul.bf16.gmra.mxu0 %v698
        %v847 = vpop.f32.mrf.mxu0
        %v848 = vadd.f32 %v718, %v847
        %v849 = vpop.f32.mrf.mxu0
        %v850 = vadd.f32 %v718, %v849
        %851 = vmatmul.bf16.gmra.mxu0 %v699
        %v852 = vpop.f32.mrf.mxu0
        %v853 = vadd.f32 %v718, %v852
        %v854 = vpop.f32.mrf.mxu0
        %v855 = vadd.f32 %v718, %v854
        %856 = vdwg.mxu0
        %v857 = vadd.f32 %v778, %v447
        %v858 = vadd.f32 %v780, %v448
        %v859 = vadd.f32 %v783, %v449
        %v860 = vadd.f32 %v785, %v450
        %v861 = vadd.f32 %v788, %v451
        %v862 = vadd.f32 %v790, %v452
        %v863 = vadd.f32 %v793, %v453
        %v864 = vadd.f32 %v795, %v454
        %v865 = vadd.f32 %v798, %v455
        %v866 = vadd.f32 %v800, %v456
        %v867 = vadd.f32 %v803, %v457
        %v868 = vadd.f32 %v805, %v458
        %v869 = vadd.f32 %v808, %v459
        %v870 = vadd.f32 %v810, %v460
        %v871 = vadd.f32 %v813, %v461
        %v872 = vadd.f32 %v815, %v462
        %v873 = vadd.f32 %v818, %v463
        %v874 = vadd.f32 %v820, %v464
        %v875 = vadd.f32 %v823, %v465
        %v876 = vadd.f32 %v825, %v466
        %v877 = vadd.f32 %v828, %v467
        %v878 = vadd.f32 %v830, %v468
        %v879 = vadd.f32 %v833, %v469
        %v880 = vadd.f32 %v835, %v470
        %v881 = vadd.f32 %v838, %v471
        %v882 = vadd.f32 %v840, %v472
        %v883 = vadd.f32 %v843, %v473
        %v884 = vadd.f32 %v845, %v474
        %v885 = vadd.f32 %v848, %v475
        %v886 = vadd.f32 %v850, %v476
        %v887 = vadd.f32 %v853, %v477
        %v888 = vadd.f32 %v855, %v478
        %v889 = vpack.c.bf16 %v858, %v857
        %v890 = vpack.c.bf16 %v860, %v859
        %v891 = vpack.c.bf16 %v862, %v861
        %v892 = vpack.c.bf16 %v864, %v863
        %v893 = vpack.c.bf16 %v866, %v865
        %v894 = vpack.c.bf16 %v868, %v867
        %v895 = vpack.c.bf16 %v870, %v869
        %v896 = vpack.c.bf16 %v872, %v871
        %v897 = vpack.c.bf16 %v874, %v873
        %v898 = vpack.c.bf16 %v876, %v875
        %v899 = vpack.c.bf16 %v878, %v877
        %v900 = vpack.c.bf16 %v880, %v879
        %v901 = vpack.c.bf16 %v882, %v881
        %v902 = vpack.c.bf16 %v884, %v883
        %v903 = vpack.c.bf16 %v886, %v885
        %v904 = vpack.c.bf16 %v888, %v887
        %v905 = vld [vmem:[#allocation10] sm:$0xf]
        %v906 = vld [vmem:[#allocation10 + $0x4] sm:$0xf]
        %v907 = vld [vmem:[#allocation10 + $0x8] sm:$0xf]
        %v908 = vld [vmem:[#allocation10 + $0xc] sm:$0xf]
        %v909 = vld [vmem:[#allocation10 + $0x10] sm:$0xf]
        %v910 = vld [vmem:[#allocation10 + $0x14] sm:$0xf]
        %v911 = vld [vmem:[#allocation10 + $0x18] sm:$0xf]
        %v912 = vld [vmem:[#allocation10 + $0x1c] sm:$0xf]
        %v913 = vld [vmem:[#allocation10 + $0x20] sm:$0xf]
        %v914 = vld [vmem:[#allocation10 + $0x24] sm:$0xf]
        %v915 = vld [vmem:[#allocation10 + $0x28] sm:$0xf]
        %v916 = vld [vmem:[#allocation10 + $0x2c] sm:$0xf]
        %v917 = vld [vmem:[#allocation10 + $0x30] sm:$0xf]
        %v918 = vld [vmem:[#allocation10 + $0x34] sm:$0xf]
        %v919 = vld [vmem:[#allocation10 + $0x38] sm:$0xf]
        %v920 = vld [vmem:[#allocation10 + $0x3c] sm:$0xf]
        %v921 = vld [vmem:[%s7] sm:$0x1]
        %v923 = vperm.slane %v921, 0
        %v941 = vunpack.c.l.b16 %v905
        %v942 = vunpack.c.l.b16 %v906
        %v943 = vunpack.c.l.b16 %v907
        %v944 = vunpack.c.l.b16 %v908
        %v945 = vunpack.c.l.b16 %v909
        %v946 = vunpack.c.l.b16 %v910
        %v947 = vunpack.c.l.b16 %v911
        %v948 = vunpack.c.l.b16 %v912
        %v949 = vunpack.c.l.b16 %v913
        %v950 = vunpack.c.l.b16 %v914
        %v951 = vunpack.c.l.b16 %v915
        %v952 = vunpack.c.l.b16 %v916
        %v953 = vunpack.c.l.b16 %v917
        %v954 = vunpack.c.l.b16 %v918
        %v955 = vunpack.c.l.b16 %v919
        %v956 = vunpack.c.l.b16 %v920
        %v957 = vpack.c.b16 %v942, %v941
        %v958 = vpack.c.b16 %v944, %v943
        %v959 = vpack.c.b16 %v946, %v945
        %v960 = vpack.c.b16 %v948, %v947
        %v961 = vpack.c.b16 %v950, %v949
        %v962 = vpack.c.b16 %v952, %v951
        %v963 = vpack.c.b16 %v954, %v953
        %v964 = vpack.c.b16 %v956, %v955
        %973 = vmatpush.bf16.msra.mxu0 %v964
        %974 = vmatpush.bf16.msra.mxu0 %v963
        %975 = vmatpush.bf16.msra.mxu0 %v962
        %976 = vmatpush.bf16.msra.mxu0 %v961
        %977 = vmatpush.bf16.msra.mxu0 %v960
        %978 = vmatpush.bf16.msra.mxu0 %v959
        %979 = vmatpush.bf16.msra.mxu0 %v958
        %980 = vmatpush.bf16.msra.mxu0 %v957
        %981 = vmatmul.bf16.gmra.mxu0 %v889
        %v982 = vpop.f32.mrf.mxu0
        %v983 = vadd.f32 %v923, %v982
        %v984 = vpop.f32.mrf.mxu0
        %v985 = vadd.f32 %v923, %v984
        %986 = vmatmul.bf16.gmra.mxu0 %v890
        %v987 = vpop.f32.mrf.mxu0
        %v988 = vadd.f32 %v923, %v987
        %v989 = vpop.f32.mrf.mxu0
        %v990 = vadd.f32 %v923, %v989
        %991 = vmatmul.bf16.gmra.mxu0 %v891
        %v992 = vpop.f32.mrf.mxu0
        %v993 = vadd.f32 %v923, %v992
        %v994 = vpop.f32.mrf.mxu0
        %v995 = vadd.f32 %v923, %v994
        %996 = vmatmul.bf16.gmra.mxu0 %v892
        %v997 = vpop.f32.mrf.mxu0
        %v998 = vadd.f32 %v923, %v997
        %v999 = vpop.f32.mrf.mxu0
        %v1000 = vadd.f32 %v923, %v999
        %1001 = vmatmul.bf16.gmra.mxu0 %v893
        %v1002 = vpop.f32.mrf.mxu0
        %v1003 = vadd.f32 %v923, %v1002
        %v1004 = vpop.f32.mrf.mxu0
        %v1005 = vadd.f32 %v923, %v1004
        %1006 = vmatmul.bf16.gmra.mxu0 %v894
        %v1007 = vpop.f32.mrf.mxu0
        %v1008 = vadd.f32 %v923, %v1007
        %v1009 = vpop.f32.mrf.mxu0
        %v1010 = vadd.f32 %v923, %v1009
        %1011 = vmatmul.bf16.gmra.mxu0 %v895
        %v1012 = vpop.f32.mrf.mxu0
        %v1013 = vadd.f32 %v923, %v1012
        %v1014 = vpop.f32.mrf.mxu0
        %v1015 = vadd.f32 %v923, %v1014
        %1016 = vmatmul.bf16.gmra.mxu0 %v896
        %v1017 = vpop.f32.mrf.mxu0
        %v1018 = vadd.f32 %v923, %v1017
        %v1019 = vpop.f32.mrf.mxu0
        %v1020 = vadd.f32 %v923, %v1019
        %1021 = vmatmul.bf16.gmra.mxu0 %v897
        %v1022 = vpop.f32.mrf.mxu0
        %v1023 = vadd.f32 %v923, %v1022
        %v1024 = vpop.f32.mrf.mxu0
        %v1025 = vadd.f32 %v923, %v1024
        %1026 = vmatmul.bf16.gmra.mxu0 %v898
        %v1027 = vpop.f32.mrf.mxu0
        %v1028 = vadd.f32 %v923, %v1027
        %v1029 = vpop.f32.mrf.mxu0
        %v1030 = vadd.f32 %v923, %v1029
        %1031 = vmatmul.bf16.gmra.mxu0 %v899
        %v1032 = vpop.f32.mrf.mxu0
        %v1033 = vadd.f32 %v923, %v1032
        %v1034 = vpop.f32.mrf.mxu0
        %v1035 = vadd.f32 %v923, %v1034
        %1036 = vmatmul.bf16.gmra.mxu0 %v900
        %v1037 = vpop.f32.mrf.mxu0
        %v1038 = vadd.f32 %v923, %v1037
        %v1039 = vpop.f32.mrf.mxu0
        %v1040 = vadd.f32 %v923, %v1039
        %1041 = vmatmul.bf16.gmra.mxu0 %v901
        %v1042 = vpop.f32.mrf.mxu0
        %v1043 = vadd.f32 %v923, %v1042
        %v1044 = vpop.f32.mrf.mxu0
        %v1045 = vadd.f32 %v923, %v1044
        %1046 = vmatmul.bf16.gmra.mxu0 %v902
        %v1047 = vpop.f32.mrf.mxu0
        %v1048 = vadd.f32 %v923, %v1047
        %v1049 = vpop.f32.mrf.mxu0
        %v1050 = vadd.f32 %v923, %v1049
        %1051 = vmatmul.bf16.gmra.mxu0 %v903
        %v1052 = vpop.f32.mrf.mxu0
        %v1053 = vadd.f32 %v923, %v1052
        %v1054 = vpop.f32.mrf.mxu0
        %v1055 = vadd.f32 %v923, %v1054
        %1056 = vmatmul.bf16.gmra.mxu0 %v904
        %v1057 = vpop.f32.mrf.mxu0
        %v1058 = vadd.f32 %v923, %v1057
        %v1059 = vpop.f32.mrf.mxu0
        %v1060 = vadd.f32 %v923, %v1059
        %1061 = vdwg.mxu0
        %1062 = vst [vmem:[%s389] sm:$0xff] %v983
        %1063 = vst [vmem:[%s389 + $0x8] sm:$0xff] %v985
        %1064 = vst [vmem:[%s389 + $0x10] sm:$0xff] %v988
        %1065 = vst [vmem:[%s389 + $0x18] sm:$0xff] %v990
        %1066 = vst [vmem:[%s389 + $0x20] sm:$0xff] %v993
        %1067 = vst [vmem:[%s389 + $0x28] sm:$0xff] %v995
        %1068 = vst [vmem:[%s389 + $0x30] sm:$0xff] %v998
        %1069 = vst [vmem:[%s389 + $0x38] sm:$0xff] %v1000
        %1070 = vst [vmem:[%s389 + $0x40] sm:$0xff] %v1003
        %1071 = vst [vmem:[%s389 + $0x48] sm:$0xff] %v1005
        %1072 = vst [vmem:[%s389 + $0x50] sm:$0xff] %v1008
        %1073 = vst [vmem:[%s389 + $0x58] sm:$0xff] %v1010
        %1074 = vst [vmem:[%s389 + $0x60] sm:$0xff] %v1013
        %1075 = vst [vmem:[%s389 + $0x68] sm:$0xff] %v1015
        %1076 = vst [vmem:[%s389 + $0x70] sm:$0xff] %v1018
        %1077 = vst [vmem:[%s389 + $0x78] sm:$0xff] %v1020
        %1078 = vst [vmem:[%s389 + $0x80] sm:$0xff] %v1023
        %1079 = vst [vmem:[%s389 + $0x88] sm:$0xff] %v1025
        %1080 = vst [vmem:[%s389 + $0x90] sm:$0xff] %v1028
        %1081 = vst [vmem:[%s389 + $0x98] sm:$0xff] %v1030
        %1082 = vst [vmem:[%s389 + $0xa0] sm:$0xff] %v1033
        %1083 = vst [vmem:[%s389 + $0xa8] sm:$0xff] %v1035
        %1084 = vst [vmem:[%s389 + $0xb0] sm:$0xff] %v1038
        %1085 = vst [vmem:[%s389 + $0xb8] sm:$0xff] %v1040
        %1086 = vst [vmem:[%s389 + $0xc0] sm:$0xff] %v1043
        %1087 = vst [vmem:[%s389 + $0xc8] sm:$0xff] %v1045
        %1088 = vst [vmem:[%s389 + $0xd0] sm:$0xff] %v1048
        %1089 = vst [vmem:[%s389 + $0xd8] sm:$0xff] %v1050
        %1090 = vst [vmem:[%s389 + $0xe0] sm:$0xff] %v1053
        %1091 = vst [vmem:[%s389 + $0xe8] sm:$0xff] %v1055
        %1092 = vst [vmem:[%s389 + $0xf0] sm:$0xff] %v1058
        %1093 = vst [vmem:[%s389 + $0xf8] sm:$0xff] %v1060
        %s1094 = sand.u32 %s208, 1
        %s1095 = scalar_lea.sflag [#allocation4], %s1094
        %s1096 = sand.u32 %s208, 1
        %s1097 = smul.addr %s1096, 256
        %s1098 = scalar_lea.vmem [#allocation11], %s1097
        // Predicated region
        $region73: #{tpu_custom_call.1} parent=51 // pred_check
          %p1099 = pneg %p218
        $region74: #{tpu_custom_call.1} parent=51 // pred_check_branch
          %1101 = sbr.rel (%p1099) target = $region76
        $region75: #{tpu_custom_call.1} parent=51 // pred_region
          %s1102 = smul.u32 32, %s27
          %1104 = vsyncadd %s1095, 0
          %s1105 = smul.addr %s1102, 8
          %s1106 = scalar_lea.hbm %s8, %s1105
          %s1107 = sshll.u32 %s1098, 4
          %s1108 = int_to_ptr.vmem [resolvable:$true] %s1107
          %s1109 = sshll.u32 %s1106, 4
          %s1110 = int_to_ptr.hbm [resolvable:$true] %s1109
          %1115 = dma.vmem_to_hbm [thread:$0]  %s1108, 4096, %s1110, %s1095, 128, 128, 8
        $region76: #{tpu_custom_call.1} parent=51 // pred_fallthru
          _
      $region52: #{tpu_custom_call.1} parent=5 // pred_fallthru
        _
      %p1116 = scmp.le.s32.totalorder 2, %s22
      // Predicated region
      $region77: #{tpu_custom_call.1} parent=5 // pred_check
        %p1117 = pneg %p1116
      $region78: #{tpu_custom_call.1} parent=5 // pred_check_branch
        %1119 = sbr.rel (%p1117) target = $region80
      $region79: #{tpu_custom_call.1} parent=5 // pred_region
        %s1120 = ssub.s32 %s22, 2
        // Predicated region
        $region81: #{tpu_custom_call.1} parent=79 // pred_check
          %p1121 = pneg %p224
        $region82: #{tpu_custom_call.1} parent=79 // pred_check_branch
          %1123 = sbr.rel (%p1121) target = $region84
        $region83: #{tpu_custom_call.1} parent=79 // pred_region
          %s1124 = sand.u32 %s209, 1
          %s1125 = scalar_lea.sflag [#allocation4], %s1124
          %s1126 = sand.u32 %s209, 1
          %s1127 = smul.addr %s1126, 256
          %s1128 = scalar_lea.vmem [#allocation11], %s1127
          %1130 = dma.done %s1125, 4096
        $region84: #{tpu_custom_call.1} parent=79 // pred_fallthru
          _
      $region80: #{tpu_custom_call.1} parent=5 // pred_fallthru
        _
    $region6: #{tpu_custom_call.1} parent=1 // loop_footer
      %s26 = sadd.s32 1, %s22
    $region7: #{tpu_custom_call.1} parent=1 // loop_footer_branch
      %21 = sbr.rel target = $region3
    $region8: #{tpu_custom_call.1} parent=1 // loop_exit
      _
    %1131 = vsyncpa [#allocation3], 1
    %s1132 = scalar_lea.sflag [#allocation3], 1
    %1133 = vsyncpa %s1132, 1
    %1134 = vsyncpa [#allocation6], 1
    %1135 = vsyncpa [#allocation9], 1
    %1136 = vsyncpa [#allocation4], 1
    %s1137 = scalar_lea.sflag [#allocation4], 1
    %1138 = vsyncpa %s1137, 1

</llo_original>
